<compile_context>
chip_gen: v5e
topology: v5e:2x2
jax: 0.10.0
libtpu: 0.0.40
codegen_flags: <defaults>
</compile_context>

<pallas_src>
import functools
import math

import jax
import jax.numpy as jnp
import numpy as np
from jax.experimental import pallas as pl
from jax.experimental.pallas import tpu as pltpu

_EPS = 1e-5


# ---------------------------------------------------------------------------
# In-kernel helpers
# ---------------------------------------------------------------------------
def _split_f32(a):
    """Split an f32 array into two bf16 limbs with hi + lo ~= a (~2^-18 rel)."""
    hi = a.astype(jnp.bfloat16)
    lo = (a - hi.astype(jnp.float32)).astype(jnp.bfloat16)
    return hi, lo


def _dot2(a_f32, b01_bf16):
    """f32 x {0,1}-matrix matmul as two native bf16 MXU passes, f32 accumulate.

    The RHS is exactly representable in bf16 (0/1), so the only error is the
    ~16-bit limb representation of the LHS - far below the LN tolerance -
    while issuing 3x fewer vmatmul pushes than a Precision.HIGHEST f32 dot.
    """
    hi, lo = _split_f32(a_f32)
    return (jnp.dot(hi, b01_bf16, preferred_element_type=jnp.float32) +
            jnp.dot(lo, b01_bf16, preferred_element_type=jnp.float32))


def _ln_kernel_biasfree(x_ref, w_ref, seg_ref, segt_ref, o_ref, *, channels):
    # x_ref  : (T, W) lane-dense slab, W = P*C (P rows of C channels each)
    # w_ref  : (1, W) weight tiled P times (f32)
    # seg_ref: (W, P) 0/1 block diagonal (bf16); segt_ref: (P, W) transpose
    x = x_ref[...].astype(jnp.float32)
    seg = seg_ref[...]
    inv_c = jnp.float32(1.0 / channels)

    s1 = _dot2(x, seg)                 # (T, P) per-row sums
    s2 = _dot2(x * x, seg)             # (T, P) per-row sums of squares

    mean = s1 * inv_c
    var = jnp.maximum(s2 * inv_c - mean * mean, 0.0)
    inv = jax.lax.rsqrt(var + _EPS)    # (T, P)

    inv_e = _dot2(inv, segt_ref[...])  # broadcast back to (T, W)
    y = x * inv_e * w_ref[...]
    o_ref[...] = y.astype(o_ref.dtype)


def _ln_kernel_withbias(x_ref, w_ref, b_ref, seg_ref, segt2_ref, o_ref, *,
                        channels):
    # segt2_ref: (2P, 2W) = block_diag(segt, segt) so that a single matmul
    # broadcasts both inv and mean (one N-tile on v6e/v7x's 256-wide MXU).
    x = x_ref[...].astype(jnp.float32)
    seg = seg_ref[...]
    inv_c = jnp.float32(1.0 / channels)

    s1 = _dot2(x, seg)
    s2 = _dot2(x * x, seg)

    mean = s1 * inv_c
    var = jnp.maximum(s2 * inv_c - mean * mean, 0.0)
    inv = jax.lax.rsqrt(var + _EPS)

    fused = jnp.concatenate([inv, mean], axis=-1)   # (T, 2P)
    bcast = _dot2(fused, segt2_ref[...])            # (T, 2W)
    w_lanes = x.shape[-1]
    inv_e = bcast[:, :w_lanes]
    mean_e = bcast[:, w_lanes:]

    y = (x - mean_e) * inv_e * w_ref[...] + b_ref[...]
    o_ref[...] = y.astype(o_ref.dtype)


# ---------------------------------------------------------------------------
# Wrapper helpers
# ---------------------------------------------------------------------------
def _choose_packing(c, max_lanes=512):
    """Rows packed per slab: P = lcm(C,128)/C when W = P*C stays small."""
    p = 128 // math.gcd(c, 128)
    return p if p * c <= max_lanes else 1


@functools.lru_cache(maxsize=None)
def _packing_constants(c, p, with_bias):
    """Cached 0/1 segment matrices (bf16 device arrays) per channel count."""
    w = p * c
    seg = np.repeat(np.eye(p, dtype=np.float32), c, axis=0)      # (W, P)
    segt = np.ascontiguousarray(seg.T)                            # (P, W)
    seg_bf = jnp.asarray(seg, dtype=jnp.bfloat16)
    if with_bias:
        segt2 = np.zeros((2 * p, 2 * w), dtype=np.float32)
        segt2[:p, :w] = segt
        segt2[p:, w:] = segt
        return seg_bf, jnp.asarray(segt2, dtype=jnp.bfloat16)
    return seg_bf, jnp.asarray(segt, dtype=jnp.bfloat16)


def _sublane_multiple(dtype):
    # (8,128) native tile for 4-byte, (16,128) for 2-byte, (32,128) for 1-byte.
    return max(8, 32 // jnp.dtype(dtype).itemsize)


def _choose_tile(n_slabs, requested, sub):
    """Row-tile size: multiple of the dtype sublane packing, or full extent.

    Small inputs are split into exactly two blocks when possible so both
    TensorCores on v7x get work with dimension_semantics=("parallel",).
    """
    requested = max(sub, (requested // sub) * sub)
    if n_slabs > requested:
        return requested
    if n_slabs >= 2 * sub:
        half = ((n_slabs + 1) // 2 + sub - 1) // sub * sub
        if half < n_slabs:
            return half
    return n_slabs


# ---------------------------------------------------------------------------
# Public entry points
# ---------------------------------------------------------------------------
def restormer_layernorm(x, weight, bias=None, *, tile_rows=2048):
    """Restormer LayerNorm over the last axis.

    bias is None  -> BiasFree_LayerNorm semantics
    bias is given -> WithBias_LayerNorm semantics
    """
    orig_shape = x.shape
    c = orig_shape[-1]
    assert weight.shape == (c,)
    with_bias = bias is not None

    x2 = x.reshape(-1, c)
    n_rows = x2.shape[0]

    # Pack P rows per lane-dense slab; pad rows to a multiple of P if needed.
    p = _choose_packing(c)
    pad = (-n_rows) % p
    if pad:
        x2 = jnp.concatenate([x2, jnp.zeros((pad, c), x2.dtype)], axis=0)
    n_slabs = (n_rows + pad) // p
    slab_w = p * c
    xs = x2.reshape(n_slabs, slab_w)

    w_packed = jnp.tile(weight.astype(jnp.float32), (p,)).reshape(1, slab_w)
    seg_bf, segt_bf = _packing_constants(c, p, with_bias)

    # Row-tile: keep ~tile_rows*128 lane-elements per block regardless of W,
    # rounded to the dtype sublane multiple.
    sub = _sublane_multiple(x.dtype)
    req = max(1, (tile_rows * 128) // slab_w)
    tile = _choose_tile(n_slabs, req, sub)
    grid = (pl.cdiv(n_slabs, tile),)

    # VMEM budget: double-buffered in/out blocks + f32 intermediates + headroom.
    io_bytes = tile * slab_w * jnp.dtype(x.dtype).itemsize
    f32_bytes = tile * slab_w * 4
    vmem_limit = int(min(max(4 * io_bytes + 8 * f32_bytes + (4 << 20),
                             32 << 20), 64 << 20))

    def _const_spec(shape):
        return pl.BlockSpec(shape, lambda i: (0, 0))

    if with_bias:
        b_packed = jnp.tile(bias.astype(jnp.float32), (p,)).reshape(1, slab_w)
        kernel = functools.partial(_ln_kernel_withbias, channels=c)
        operands = (xs, w_packed, b_packed, seg_bf, segt_bf)
        in_specs = [
            pl.BlockSpec((tile, slab_w), lambda i: (i, 0)),
            _const_spec((1, slab_w)),
            _const_spec((1, slab_w)),
            _const_spec((slab_w, p)),
            _const_spec((2 * p, 2 * slab_w)),
        ]
    else:
        kernel = functools.partial(_ln_kernel_biasfree, channels=c)
        operands = (xs, w_packed, seg_bf, segt_bf)
        in_specs = [
            pl.BlockSpec((tile, slab_w), lambda i: (i, 0)),
            _const_spec((1, slab_w)),
            _const_spec((slab_w, p)),
            _const_spec((p, slab_w)),
        ]

    out = pl.pallas_call(
        kernel,
        out_shape=jax.ShapeDtypeStruct((n_slabs, slab_w), x.dtype),
        grid_spec=pltpu.PrefetchScalarGridSpec(
            num_scalar_prefetch=0,
            grid=grid,
            in_specs=in_specs,
            out_specs=pl.BlockSpec((tile, slab_w), lambda i: (i, 0)),
        ),
        compiler_params=pltpu.CompilerParams(
            dimension_semantics=("parallel",),
            vmem_limit_bytes=vmem_limit,
        ),
    )(*operands)

    out = out.reshape(n_slabs * p, c)
    if pad:
        out = out[:n_rows]
    return out.reshape(orig_shape)


def biasfree_layernorm(x, weight, *, tile_rows=2048):
    return restormer_layernorm(x, weight, None, tile_rows=tile_rows)


def withbias_layernorm(x, weight, bias, *, tile_rows=2048):
    return restormer_layernorm(x, weight, bias, tile_rows=tile_rows)


def _ref_ln(x, w, b=None):
    """Plain-JAX reference matching the PyTorch forward."""
    x32 = x.astype(jnp.float32)
    mu = jnp.mean(x32, axis=-1, keepdims=True)
    var = jnp.mean((x32 - mu) ** 2, axis=-1, keepdims=True)
    if b is None:
        y = x32 / jnp.sqrt(var + 1e-5) * w
    else:
        y = (x32 - mu) / jnp.sqrt(var + 1e-5) * w + b
    return y.astype(x.dtype)


if __name__ == "__main__":
    key = jax.random.PRNGKey(0)
    k1, k2, k3, k4, k5, k6 = jax.random.split(key, 6)

    # LayerNorm in UCS_Block_Resformer runs on to_3d(x) = (b, h*w, c) with
    # c = inChannels.  Small demo: inChannels=32, h=w=16, batch=2.
    batch, ch, hgt, wid = 2, 32, 16, 16
    x = jax.random.normal(k1, (batch, hgt * wid, ch), dtype=jnp.float32)

    # Module parameter init: weight = ones, bias = zeros.
    weight = jnp.ones((ch,), dtype=jnp.float32)
    bias = jnp.zeros((ch,), dtype=jnp.float32)

    # WithBias (the module's default LayerNorm_type).
    out_wb = jax.block_until_ready(withbias_layernorm(x, weight, bias))
    ref_wb = _ref_ln(x, weight, bias)
    assert jnp.allclose(out_wb, ref_wb, rtol=1e-4, atol=1e-4), "WithBias mismatch"

    # BiasFree variant.
    out_bf = jax.block_until_ready(biasfree_layernorm(x, weight))
    ref_bf = _ref_ln(x, weight)
    assert jnp.allclose(out_bf, ref_bf, rtol=1e-4, atol=1e-4), "BiasFree mismatch"

    # Row-padding (199 rows -> pad 1) + masked partial last grid block, with
    # non-trivial weight/bias.
    x_b = jax.random.normal(k2, (1, 199, ch), dtype=jnp.float32)
    w_b = jax.random.normal(k3, (ch,), dtype=jnp.float32)
    b_b = jax.random.normal(k4, (ch,), dtype=jnp.float32)
    out_b = jax.block_until_ready(withbias_layernorm(x_b, w_b, b_b))
    assert jnp.allclose(out_b, _ref_ln(x_b, w_b, b_b), rtol=1e-4, atol=1e-4), \
        "padded-rows mismatch"

    # Channel count packed to a 384-lane slab (c=96 -> P=4, W=384).
    x_c = jax.random.normal(k5, (2, 32, 96), dtype=jnp.float32)
    w_c = jnp.ones((96,), dtype=jnp.float32)
    out_c = jax.block_until_ready(biasfree_layernorm(x_c, w_c))
    assert jnp.allclose(out_c, _ref_ln(x_c, w_c), rtol=1e-4, atol=1e-4), \
        "c=96 packed mismatch"

    # Channel count that stays un-packed (P=1 lane-masked fallback).
    x_d = jax.random.normal(k6, (2, 8, 160), dtype=jnp.float32)
    w_d = jnp.ones((160,), dtype=jnp.float32)
    out_d = jax.block_until_ready(biasfree_layernorm(x_d, w_d))
    assert jnp.allclose(out_d, _ref_ln(x_d, w_d), rtol=1e-4, atol=1e-4), \
        "unpacked fallback mismatch"

    # bf16 activations exercise the dtype-aware (16-sublane) row tiling.
    x_e = x.astype(jnp.bfloat16)
    out_e = jax.block_until_ready(withbias_layernorm(x_e, weight, bias))
    assert jnp.allclose(out_e.astype(jnp.float32),
                        _ref_ln(x_e, weight, bias).astype(jnp.float32),
                        rtol=2e-2, atol=2e-2), "bf16 mismatch"

    print("KERNEL_OK")
</pallas_src>

<mosaic_0001>
module attributes {stable_mosaic.version = 11 : i64} {
  func.func @_ln_kernel_withbias(%arg0: i32, %arg1: memref<64x128xf32, #tpu.memory_space<vmem>>, %arg2: memref<1x128xf32, #tpu.memory_space<vmem>>, %arg3: memref<1x128xf32, #tpu.memory_space<vmem>>, %arg4: memref<128x4xbf16, #tpu.memory_space<vmem>>, %arg5: memref<8x256xbf16, #tpu.memory_space<vmem>>, %arg6: memref<64x128xf32, #tpu.memory_space<vmem>>) attributes {dimension_semantics = [#tpu.dimension_semantics<parallel>], iteration_bounds = array<i64: 2>, scalar_prefetch = 0 : i64, scratch_operands = 0 : i64, tpu.core_type = #tpu.core_type<tc>, window_params = [{transform_indices = @transform_0, window_bounds = array<i64: 64, 128>}, {pipeline_mode = #tpu.pipeline_mode<synchronous>, transform_indices = @transform_1, window_bounds = array<i64: 1, 128>}, {pipeline_mode = #tpu.pipeline_mode<synchronous>, transform_indices = @transform_2, window_bounds = array<i64: 1, 128>}, {pipeline_mode = #tpu.pipeline_mode<synchronous>, transform_indices = @transform_3, window_bounds = array<i64: 128, 4>}, {pipeline_mode = #tpu.pipeline_mode<synchronous>, transform_indices = @transform_4, window_bounds = array<i64: 8, 256>}, {transform_indices = @transform_5, window_bounds = array<i64: 64, 128>}]} {
    %c0 = arith.constant 0 : index
    %c0_0 = arith.constant 0 : index
    %0 = vector.load %arg1[%c0, %c0_0] : memref<64x128xf32, #tpu.memory_space<vmem>>, vector<64x128xf32>
    %c0_1 = arith.constant 0 : index
    %c0_2 = arith.constant 0 : index
    %1 = vector.load %arg4[%c0_1, %c0_2] : memref<128x4xbf16, #tpu.memory_space<vmem>>, vector<128x4xbf16>
    %2 = arith.truncf %0 : vector<64x128xf32> to vector<64x128xbf16>
    %3 = arith.extf %2 : vector<64x128xbf16> to vector<64x128xf32>
    %4 = arith.subf %0, %3 : vector<64x128xf32>
    %5 = arith.truncf %4 : vector<64x128xf32> to vector<64x128xbf16>
    %cst = arith.constant dense<0.000000e+00> : vector<64x4xf32>
    %6 = tpu.matmul %2, %1, %cst {dimension_numbers = #tpu.dot_dimension_numbers<[1], [0], [0], [1], [0, 0, 1, 1], [], []>} : vector<64x128xbf16>, vector<128x4xbf16>, vector<64x4xf32> -> vector<64x4xf32>
    %cst_3 = arith.constant dense<0.000000e+00> : vector<64x4xf32>
    %7 = tpu.matmul %5, %1, %cst_3 {dimension_numbers = #tpu.dot_dimension_numbers<[1], [0], [0], [1], [0, 0, 1, 1], [], []>} : vector<64x128xbf16>, vector<128x4xbf16>, vector<64x4xf32> -> vector<64x4xf32>
    %8 = arith.addf %6, %7 : vector<64x4xf32>
    %9 = arith.mulf %0, %0 : vector<64x128xf32>
    %10 = arith.truncf %9 : vector<64x128xf32> to vector<64x128xbf16>
    %11 = arith.extf %10 : vector<64x128xbf16> to vector<64x128xf32>
    %12 = arith.subf %9, %11 : vector<64x128xf32>
    %13 = arith.truncf %12 : vector<64x128xf32> to vector<64x128xbf16>
    %cst_4 = arith.constant dense<0.000000e+00> : vector<64x4xf32>
    %14 = tpu.matmul %10, %1, %cst_4 {dimension_numbers = #tpu.dot_dimension_numbers<[1], [0], [0], [1], [0, 0, 1, 1], [], []>} : vector<64x128xbf16>, vector<128x4xbf16>, vector<64x4xf32> -> vector<64x4xf32>
    %cst_5 = arith.constant dense<0.000000e+00> : vector<64x4xf32>
    %15 = tpu.matmul %13, %1, %cst_5 {dimension_numbers = #tpu.dot_dimension_numbers<[1], [0], [0], [1], [0, 0, 1, 1], [], []>} : vector<64x128xbf16>, vector<128x4xbf16>, vector<64x4xf32> -> vector<64x4xf32>
    %16 = arith.addf %14, %15 : vector<64x4xf32>
    %cst_6 = arith.constant 3.125000e-02 : f32
    %17 = vector.broadcast %cst_6 : f32 to vector<64x4xf32>
    %18 = arith.mulf %8, %17 : vector<64x4xf32>
    %cst_7 = arith.constant 3.125000e-02 : f32
    %19 = vector.broadcast %cst_7 : f32 to vector<64x4xf32>
    %20 = arith.mulf %16, %19 : vector<64x4xf32>
    %21 = arith.mulf %18, %18 : vector<64x4xf32>
    %22 = arith.subf %20, %21 : vector<64x4xf32>
    %cst_8 = arith.constant 0.000000e+00 : f32
    %23 = vector.broadcast %cst_8 : f32 to vector<64x4xf32>
    %24 = arith.maximumf %22, %23 : vector<64x4xf32>
    %cst_9 = arith.constant 9.99999974E-6 : f32
    %25 = vector.broadcast %cst_9 : f32 to vector<64x4xf32>
    %26 = arith.addf %24, %25 : vector<64x4xf32>
    %27 = math.rsqrt %26 : vector<64x4xf32>
    %28 = tpu.concatenate %27, %18 in 1 : vector<64x4xf32>, vector<64x4xf32> -> vector<64x8xf32>
    %c0_10 = arith.constant 0 : index
    %c0_11 = arith.constant 0 : index
    %29 = vector.load %arg5[%c0_10, %c0_11] : memref<8x256xbf16, #tpu.memory_space<vmem>>, vector<8x256xbf16>
    %30 = arith.truncf %28 : vector<64x8xf32> to vector<64x8xbf16>
    %31 = arith.extf %30 : vector<64x8xbf16> to vector<64x8xf32>
    %32 = arith.subf %28, %31 : vector<64x8xf32>
    %33 = arith.truncf %32 : vector<64x8xf32> to vector<64x8xbf16>
    %cst_12 = arith.constant dense<0.000000e+00> : vector<64x256xf32>
    %34 = tpu.matmul %30, %29, %cst_12 {dimension_numbers = #tpu.dot_dimension_numbers<[1], [0], [0], [1], [0, 0, 1, 1], [], []>} : vector<64x8xbf16>, vector<8x256xbf16>, vector<64x256xf32> -> vector<64x256xf32>
    %cst_13 = arith.constant dense<0.000000e+00> : vector<64x256xf32>
    %35 = tpu.matmul %33, %29, %cst_13 {dimension_numbers = #tpu.dot_dimension_numbers<[1], [0], [0], [1], [0, 0, 1, 1], [], []>} : vector<64x8xbf16>, vector<8x256xbf16>, vector<64x256xf32> -> vector<64x256xf32>
    %36 = arith.addf %34, %35 : vector<64x256xf32>
    %37 = vector.extract_strided_slice %36 {offsets = [0, 0], sizes = [64, 128], strides = [1, 1]} : vector<64x256xf32> to vector<64x128xf32>
    %38 = vector.extract_strided_slice %36 {offsets = [0, 128], sizes = [64, 128], strides = [1, 1]} : vector<64x256xf32> to vector<64x128xf32>
    %39 = arith.subf %0, %38 : vector<64x128xf32>
    %40 = arith.mulf %39, %37 : vector<64x128xf32>
    %c0_14 = arith.constant 0 : index
    %c0_15 = arith.constant 0 : index
    %41 = vector.load %arg2[%c0_14, %c0_15] : memref<1x128xf32, #tpu.memory_space<vmem>>, vector<1x128xf32>
    %42 = vector.broadcast %41 : vector<1x128xf32> to vector<64x128xf32>
    %43 = arith.mulf %40, %42 : vector<64x128xf32>
    %c0_16 = arith.constant 0 : index
    %c0_17 = arith.constant 0 : index
    %44 = vector.load %arg3[%c0_16, %c0_17] : memref<1x128xf32, #tpu.memory_space<vmem>>, vector<1x128xf32>
    %45 = vector.broadcast %44 : vector<1x128xf32> to vector<64x128xf32>
    %46 = arith.addf %43, %45 : vector<64x128xf32>
    %c0_18 = arith.constant 0 : index
    %c0_19 = arith.constant 0 : index
    %47 = vector.load %arg6[%c0_18, %c0_19] : memref<64x128xf32, #tpu.memory_space<vmem>>, vector<64x128xf32>
    tpu.vector_store %arg6[%c0_18, %c0_19], %46 {strides = array<i32>} : memref<64x128xf32, #tpu.memory_space<vmem>>, vector<64x128xf32>,
    return
  }
  func.func @transform_0(%arg0: i32) -> (i32, i32) {
    %c0_i32 = arith.constant 0 : i32
    %c0_i32_0 = arith.constant 0 : i32
    return %arg0, %c0_i32 : i32, i32
  }
  func.func @transform_1(%arg0: i32) -> (i32, i32) {
    %c0_i32 = arith.constant 0 : i32
    %c0_i32_0 = arith.constant 0 : i32
    %c0_i32_1 = arith.constant 0 : i32
    return %c0_i32, %c0_i32_0 : i32, i32
  }
  func.func @transform_2(%arg0: i32) -> (i32, i32) {
    %c0_i32 = arith.constant 0 : i32
    %c0_i32_0 = arith.constant 0 : i32
    %c0_i32_1 = arith.constant 0 : i32
    return %c0_i32, %c0_i32_0 : i32, i32
  }
  func.func @transform_3(%arg0: i32) -> (i32, i32) {
    %c0_i32 = arith.constant 0 : i32
    %c0_i32_0 = arith.constant 0 : i32
    %c0_i32_1 = arith.constant 0 : i32
    return %c0_i32, %c0_i32_0 : i32, i32
  }
  func.func @transform_4(%arg0: i32) -> (i32, i32) {
    %c0_i32 = arith.constant 0 : i32
    %c0_i32_0 = arith.constant 0 : i32
    %c0_i32_1 = arith.constant 0 : i32
    return %c0_i32, %c0_i32_0 : i32, i32
  }
  func.func @transform_5(%arg0: i32) -> (i32, i32) {
    %c0_i32 = arith.constant 0 : i32
    %c0_i32_0 = arith.constant 0 : i32
    return %arg0, %c0_i32 : i32, i32
  }
}

</mosaic_0001>

<llo_original>
// kernel: tpu_custom_call.1
$region0: #{tpu_custom_call.1}
  #allocation0 [shape = 'u32[]', space=smem, size = 0x4, offset = 0x4, fixed_abs, tag = 'smem constant byte address 0x4 - core index']
  #allocation1 [shape = 'u32[72,128]{1,0:T(1,128)}', space=vmem, size = 0x9000, scoped, tag = 'internal scratch']
  %s0 = inlined_call_operand.hbm [shape: f32[128,128], index: 0, kind: input, shape index: {}]
  %s1 = inlined_call_operand.vmem [shape: f32[1,128], index: 1, kind: input, shape index: {}]
  %s2 = inlined_call_operand.vmem [shape: f32[1,128], index: 2, kind: input, shape index: {}]
  %s3 = inlined_call_operand.vmem [shape: bf16[128,4], index: 3, kind: input, shape index: {}]
  %s4 = inlined_call_operand.vmem [shape: bf16[8,256], index: 4, kind: input, shape index: {}]
  %s5 = inlined_call_operand.hbm [shape: f32[128,128], index: 5, kind: output, shape index: {}]
  %s6 = sld [smem:[#allocation0]]
  $region57: #{tpu_custom_call.1} parent=0
    _
  %s8 = ssub.s32 1, %s6
  %s9 = scalar_select 0, %s8, %s6
  $region1: #{tpu_custom_call.1} parent=0
    #allocation2 [shape = 'u8[65536]{0}', space=vmem, size = 0x10000, scoped, tag = 'input window, operand 0']
    #allocation3 [shape = 's32[2]{0}', space=sflag, size = 0x8, scoped, tag = 'scoped memory for tpu_custom_call.1']
    #allocation4 [shape = 's32[2]{0}', space=sflag, size = 0x8, scoped, tag = 'scoped memory for tpu_custom_call.1']
    #allocation5 [shape = 'u8[65536]{0}', space=vmem, size = 0x10000, scoped, tag = 'output window, operand 0']
    %10 = vsyncpa [#allocation3], 0
    %s11 = scalar_lea.sflag [#allocation3], 1
    %12 = vsyncpa %s11, 0
    %13 = vsyncpa [#allocation4], 0
    %s14 = scalar_lea.sflag [#allocation4], 1
    %15 = vsyncpa %s14, 0
    loop: start=0, step=1, limit=4
    $region2: #{tpu_custom_call.1} parent=1 // loop_pre_header
      _
    $region3: #{tpu_custom_call.1} parent=1 // loop_header
      %s17 = sphi 0, %s21
      %p18 = scmp.ge.s32.totalorder %s17, 4
      %s27 = sphi 0, %s29
      %s30 = sphi 0, %s27
      %s31 = sphi 0, %s30
      %s47 = sphi 0, %s31
      %s51 = sphi 0, %s51
      %s53 = sphi 0, %s51
      %s54 = sphi 0, %s53
      %s68 = sphi 0, %s54
      %s72 = sphi 0, %s72
      %s74 = sphi 0, %s72
      %s75 = sphi 0, %s74
      %s89 = sphi 0, %s75
      %s93 = sphi 0, %s93
      %s95 = sphi 0, %s93
      %s96 = sphi 0, %s95
      %s110 = sphi 0, %s96
      %s114 = sphi 0, %s114
      %s116 = sphi 0, %s114
      %s117 = sphi 0, %s116
      %s131 = sphi 0, %s117
      %s137 = sphi 0, %s139
      %s140 = sphi 0, %s137
      %s141 = sphi 0, %s140
      %s157 = sphi 0, %s141
    $region4: #{tpu_custom_call.1} parent=1 // loop_header_branch
      %20 = sbr.rel (%p18) target = $region8
    $region5: #{tpu_custom_call.1} parent=1 // loop_body
      %s22 = ssub.s32 %s17, 1
      %s23 = ssub.s32 %s17, 2
      %s24 = sadd.s32 %s17, 1
      %s25 = ssub.s32 %s17, %s24
      %p26 = scmp.eq.s32.totalorder %s25, 0
      %s28 = sadd.s32 %s27, 1
      %s29 = scalar_select %p26, %s27, %s28
      %p32 = pneg %p26
      %p33 = scmp.eq.s32.totalorder %s17, 1
      %p34 = por %p32, %p33
      %p35 = scmp.ne.s32.totalorder %s27, %s30
      %p36 = scmp.eq.s32.totalorder %s17, 0
      %p37 = por %p35, %p36
      %p38 = scmp.ne.s32.totalorder %s27, %s30
      %p39 = scmp.eq.s32.totalorder %s22, 1
      %p40 = por %p38, %p39
      %p41 = scmp.ne.s32.totalorder %s30, %s31
      %p42 = scmp.eq.s32.totalorder %s22, 0
      %p43 = por %p41, %p42
      %p44 = scmp.ne.s32.totalorder %s30, %s31
      %p45 = scmp.eq.s32.totalorder %s23, 1
      %p46 = por %p44, %p45
      %p48 = scmp.ne.s32.totalorder %s31, %s47
      %p49 = scmp.eq.s32.totalorder %s23, 0
      %p50 = por %p48, %p49
      %s52 = sadd.s32 %s51, 1
      %p55 = scmp.eq.s32.totalorder %s17, 1
      %p56 = scmp.ne.s32.totalorder %s51, %s53
      %p57 = scmp.eq.s32.totalorder %s17, 0
      %p58 = por %p56, %p57
      %p59 = scmp.ne.s32.totalorder %s51, %s53
      %p60 = scmp.eq.s32.totalorder %s22, 1
      %p61 = por %p59, %p60
      %p62 = scmp.ne.s32.totalorder %s53, %s54
      %p63 = scmp.eq.s32.totalorder %s22, 0
      %p64 = por %p62, %p63
      %p65 = scmp.ne.s32.totalorder %s53, %s54
      %p66 = scmp.eq.s32.totalorder %s23, 1
      %p67 = por %p65, %p66
      %p69 = scmp.ne.s32.totalorder %s54, %s68
      %p70 = scmp.eq.s32.totalorder %s23, 0
      %p71 = por %p69, %p70
      %s73 = sadd.s32 %s72, 1
      %p76 = scmp.eq.s32.totalorder %s17, 1
      %p77 = scmp.ne.s32.totalorder %s72, %s74
      %p78 = scmp.eq.s32.totalorder %s17, 0
      %p79 = por %p77, %p78
      %p80 = scmp.ne.s32.totalorder %s72, %s74
      %p81 = scmp.eq.s32.totalorder %s22, 1
      %p82 = por %p80, %p81
      %p83 = scmp.ne.s32.totalorder %s74, %s75
      %p84 = scmp.eq.s32.totalorder %s22, 0
      %p85 = por %p83, %p84
      %p86 = scmp.ne.s32.totalorder %s74, %s75
      %p87 = scmp.eq.s32.totalorder %s23, 1
      %p88 = por %p86, %p87
      %p90 = scmp.ne.s32.totalorder %s75, %s89
      %p91 = scmp.eq.s32.totalorder %s23, 0
      %p92 = por %p90, %p91
      %s94 = sadd.s32 %s93, 1
      %p97 = scmp.eq.s32.totalorder %s17, 1
      %p98 = scmp.ne.s32.totalorder %s93, %s95
      %p99 = scmp.eq.s32.totalorder %s17, 0
      %p100 = por %p98, %p99
      %p101 = scmp.ne.s32.totalorder %s93, %s95
      %p102 = scmp.eq.s32.totalorder %s22, 1
      %p103 = por %p101, %p102
      %p104 = scmp.ne.s32.totalorder %s95, %s96
      %p105 = scmp.eq.s32.totalorder %s22, 0
      %p106 = por %p104, %p105
      %p107 = scmp.ne.s32.totalorder %s95, %s96
      %p108 = scmp.eq.s32.totalorder %s23, 1
      %p109 = por %p107, %p108
      %p111 = scmp.ne.s32.totalorder %s96, %s110
      %p112 = scmp.eq.s32.totalorder %s23, 0
      %p113 = por %p111, %p112
      %s115 = sadd.s32 %s114, 1
      %p118 = scmp.eq.s32.totalorder %s17, 1
      %p119 = scmp.ne.s32.totalorder %s114, %s116
      %p120 = scmp.eq.s32.totalorder %s17, 0
      %p121 = por %p119, %p120
      %p122 = scmp.ne.s32.totalorder %s114, %s116
      %p123 = scmp.eq.s32.totalorder %s22, 1
      %p124 = por %p122, %p123
      %p125 = scmp.ne.s32.totalorder %s116, %s117
      %p126 = scmp.eq.s32.totalorder %s22, 0
      %p127 = por %p125, %p126
      %p128 = scmp.ne.s32.totalorder %s116, %s117
      %p129 = scmp.eq.s32.totalorder %s23, 1
      %p130 = por %p128, %p129
      %p132 = scmp.ne.s32.totalorder %s117, %s131
      %p133 = scmp.eq.s32.totalorder %s23, 0
      %p134 = por %p132, %p133
      %s135 = ssub.s32 %s17, %s24
      %p136 = scmp.eq.s32.totalorder %s135, 0
      %s138 = sadd.s32 %s137, 1
      %s139 = scalar_select %p136, %s137, %s138
      %p142 = pneg %p136
      %p143 = scmp.eq.s32.totalorder %s17, 1
      %p144 = por %p142, %p143
      %p145 = scmp.ne.s32.totalorder %s137, %s140
      %p146 = scmp.eq.s32.totalorder %s17, 0
      %p147 = por %p145, %p146
      %p148 = scmp.ne.s32.totalorder %s137, %s140
      %p149 = scmp.eq.s32.totalorder %s22, 1
      %p150 = por %p148, %p149
      %p151 = scmp.ne.s32.totalorder %s140, %s141
      %p152 = scmp.eq.s32.totalorder %s22, 0
      %p153 = por %p151, %p152
      %p154 = scmp.ne.s32.totalorder %s140, %s141
      %p155 = scmp.eq.s32.totalorder %s23, 1
      %p156 = por %p154, %p155
      %p158 = scmp.ne.s32.totalorder %s141, %s157
      %p159 = scmp.eq.s32.totalorder %s23, 0
      %p160 = por %p158, %p159
      %p161 = scmp.le.s32.totalorder 1, %s17
      %p162 = scmp.lt.s32.totalorder %s17, 3
      %p163 = pnand %p161, %p162
      %p164 = pneg %p163
      // Predicated region
      $region9: #{tpu_custom_call.1} parent=5 // pred_check
        _
      $region10: #{tpu_custom_call.1} parent=5 // pred_check_branch
        %166 = sbr.rel (%p163) target = $region12
      $region11: #{tpu_custom_call.1} parent=5 // pred_region
        %s167 = ssub.s32 %s17, 1
        // Predicated region
        $region13: #{tpu_custom_call.1} parent=11 // pred_check
          %p168 = pneg %p64
        $region14: #{tpu_custom_call.1} parent=11 // pred_check_branch
          %170 = sbr.rel (%p168) target = $region16
        $region15: #{tpu_custom_call.1} parent=11 // pred_region
          _
        $region16: #{tpu_custom_call.1} parent=11 // pred_fallthru
          _
        // Predicated region
        $region17: #{tpu_custom_call.1} parent=11 // pred_check
          %p171 = pneg %p85
        $region18: #{tpu_custom_call.1} parent=11 // pred_check_branch
          %173 = sbr.rel (%p171) target = $region20
        $region19: #{tpu_custom_call.1} parent=11 // pred_region
          _
        $region20: #{tpu_custom_call.1} parent=11 // pred_fallthru
          _
        // Predicated region
        $region21: #{tpu_custom_call.1} parent=11 // pred_check
          %p174 = pneg %p106
        $region22: #{tpu_custom_call.1} parent=11 // pred_check_branch
          %176 = sbr.rel (%p174) target = $region24
        $region23: #{tpu_custom_call.1} parent=11 // pred_region
          _
        $region24: #{tpu_custom_call.1} parent=11 // pred_fallthru
          _
        // Predicated region
        $region25: #{tpu_custom_call.1} parent=11 // pred_check
          %p177 = pneg %p127
        $region26: #{tpu_custom_call.1} parent=11 // pred_check_branch
          %179 = sbr.rel (%p177) target = $region28
        $region27: #{tpu_custom_call.1} parent=11 // pred_region
          _
        $region28: #{tpu_custom_call.1} parent=11 // pred_fallthru
          _
      $region12: #{tpu_custom_call.1} parent=5 // pred_fallthru
        _
      %p180 = scmp.lt.s32.totalorder %s17, 2
      // Predicated region
      $region29: #{tpu_custom_call.1} parent=5 // pred_check
        %p181 = pneg %p180
      $region30: #{tpu_custom_call.1} parent=5 // pred_check_branch
        %183 = sbr.rel (%p181) target = $region32
      $region31: #{tpu_custom_call.1} parent=5 // pred_region
        // Predicated region
        $region33: #{tpu_custom_call.1} parent=31 // pred_check
          %p184 = pneg %p37
        $region34: #{tpu_custom_call.1} parent=31 // pred_check_branch
          %186 = sbr.rel (%p184) target = $region36
        $region35: #{tpu_custom_call.1} parent=31 // pred_region
          %s187 = sand.u32 %s27, 1
          %s188 = scalar_lea.sflag [#allocation3], %s187
          %s189 = sand.u32 %s27, 1
          %s190 = smul.addr %s189, 64
          %s191 = scalar_lea.vmem [#allocation2], %s190
          %s192 = smul.u32 8, %s17
          %194 = vsyncadd %s188, 0
          %s195 = smul.addr %s192, 8
          %s196 = scalar_lea.hbm %s0, %s195
          %s197 = sshll.u32 %s196, 4
          %s198 = int_to_ptr.hbm [resolvable:$true] %s197
          %s199 = sshll.u32 %s191, 4
          %s200 = int_to_ptr.vmem [resolvable:$true] %s199
          %205 = dma.hbm_to_vmem [thread:$0]  %s198, 1024, %s200, %s188, 128, 128, 8
        $region36: #{tpu_custom_call.1} parent=31 // pred_fallthru
          _
      $region32: #{tpu_custom_call.1} parent=5 // pred_fallthru
        _
      %p206 = scmp.le.s32.totalorder 1, %s17
      %p207 = scmp.lt.s32.totalorder %s17, 3
      %p208 = pnand %p206, %p207
      %p209 = pneg %p208
      // Predicated region
      $region37: #{tpu_custom_call.1} parent=5 // pred_check
        _
      $region38: #{tpu_custom_call.1} parent=5 // pred_check_branch
        %211 = sbr.rel (%p208) target = $region40
      $region39: #{tpu_custom_call.1} parent=5 // pred_region
        %s212 = ssub.s32 %s17, 1
        %s213 = sand.u32 %s30, 1
        %s214 = scalar_lea.sflag [#allocation3], %s213
        %s215 = sand.u32 %s30, 1
        %s216 = smul.addr %s215, 64
        %s217 = scalar_lea.vmem [#allocation2], %s216
        // Predicated region
        $region41: #{tpu_custom_call.1} parent=39 // pred_check
          %p218 = pneg %p43
        $region42: #{tpu_custom_call.1} parent=39 // pred_check_branch
          %220 = sbr.rel (%p218) target = $region44
        $region43: #{tpu_custom_call.1} parent=39 // pred_region
          %222 = dma.done %s214, 1024
        $region44: #{tpu_custom_call.1} parent=39 // pred_fallthru
          _
        %s223 = sand.u32 %s30, 1
        %s224 = scalar_lea.sflag [#allocation3], %s223
        %s225 = sand.u32 %s30, 1
        %s226 = smul.addr %s225, 64
        %s227 = scalar_lea.vmem [#allocation2], %s226
        %p228 = pneg %p43
        %p229 = pneg %p40
        %p230 = pneg %p64
        %p231 = pneg %p61
        %p232 = pneg %p85
        %p233 = pneg %p82
        %p234 = pneg %p106
        %p235 = pneg %p103
        %p236 = pneg %p127
        %p237 = pneg %p124
        %p238 = pneg %p153
        %p239 = pneg %p150
        %s240 = sand.u32 %s140, 1
        %s241 = scalar_lea.sflag [#allocation4], %s240
        %s242 = sand.u32 %s140, 1
        %s243 = smul.addr %s242, 64
        %s244 = scalar_lea.vmem [#allocation5], %s243
        %s245 = smul.u32 8, %s22
        %s246 = smul.u32 8, %s22
        %v248 = vld [vmem:[%s217] sm:$0xff]
        %v249 = vld [vmem:[%s217 + $0x8] sm:$0xff]
        %v250 = vld [vmem:[%s217 + $0x10] sm:$0xff]
        %v251 = vld [vmem:[%s217 + $0x18] sm:$0xff]
        %v252 = vld [vmem:[%s217 + $0x20] sm:$0xff]
        %v253 = vld [vmem:[%s217 + $0x28] sm:$0xff]
        %v254 = vld [vmem:[%s217 + $0x30] sm:$0xff]
        %v255 = vld [vmem:[%s217 + $0x38] sm:$0xff]
        %v256 = vld [vmem:[%s3] sm:$0xf]
        %v257 = vld [vmem:[%s3 + $0x4] sm:$0xf]
        %v258 = vld [vmem:[%s3 + $0x8] sm:$0xf]
        %v259 = vld [vmem:[%s3 + $0xc] sm:$0xf]
        %v260 = vld [vmem:[%s3 + $0x10] sm:$0xf]
        %v261 = vld [vmem:[%s3 + $0x14] sm:$0xf]
        %v262 = vld [vmem:[%s3 + $0x18] sm:$0xf]
        %v263 = vld [vmem:[%s3 + $0x1c] sm:$0xf]
        %v264 = vld [vmem:[%s3 + $0x20] sm:$0xf]
        %v265 = vld [vmem:[%s3 + $0x24] sm:$0xf]
        %v266 = vld [vmem:[%s3 + $0x28] sm:$0xf]
        %v267 = vld [vmem:[%s3 + $0x2c] sm:$0xf]
        %v268 = vld [vmem:[%s3 + $0x30] sm:$0xf]
        %v269 = vld [vmem:[%s3 + $0x34] sm:$0xf]
        %v270 = vld [vmem:[%s3 + $0x38] sm:$0xf]
        %v271 = vld [vmem:[%s3 + $0x3c] sm:$0xf]
        %v272 = vpack.c.bf16 %v248, %v248
        %v273 = vpack.c.bf16 %v249, %v249
        %v274 = vpack.c.bf16 %v250, %v250
        %v275 = vpack.c.bf16 %v251, %v251
        %v276 = vpack.c.bf16 %v252, %v252
        %v277 = vpack.c.bf16 %v253, %v253
        %v278 = vpack.c.bf16 %v254, %v254
        %v279 = vpack.c.bf16 %v255, %v255
        %v280 = vunpack.c.l.bf16 %v272
        %v281 = vunpack.c.l.bf16 %v273
        %v282 = vunpack.c.l.bf16 %v274
        %v283 = vunpack.c.l.bf16 %v275
        %v284 = vunpack.c.l.bf16 %v276
        %v285 = vunpack.c.l.bf16 %v277
        %v286 = vunpack.c.l.bf16 %v278
        %v287 = vunpack.c.l.bf16 %v279
        %v288 = vsub.f32 %v248, %v280
        %v289 = vsub.f32 %v249, %v281
        %v290 = vsub.f32 %v250, %v282
        %v291 = vsub.f32 %v251, %v283
        %v292 = vsub.f32 %v252, %v284
        %v293 = vsub.f32 %v253, %v285
        %v294 = vsub.f32 %v254, %v286
        %v295 = vsub.f32 %v255, %v287
        %v296 = vpack.c.bf16 %v289, %v288
        %v297 = vpack.c.bf16 %v291, %v290
        %v298 = vpack.c.bf16 %v293, %v292
        %v299 = vpack.c.bf16 %v295, %v294
        %v316 = vunpack.c.l.b16 %v256
        %v317 = vunpack.c.l.b16 %v257
        %v318 = vunpack.c.l.b16 %v258
        %v319 = vunpack.c.l.b16 %v259
        %v320 = vunpack.c.l.b16 %v260
        %v321 = vunpack.c.l.b16 %v261
        %v322 = vunpack.c.l.b16 %v262
        %v323 = vunpack.c.l.b16 %v263
        %v324 = vunpack.c.l.b16 %v264
        %v325 = vunpack.c.l.b16 %v265
        %v326 = vunpack.c.l.b16 %v266
        %v327 = vunpack.c.l.b16 %v267
        %v328 = vunpack.c.l.b16 %v268
        %v329 = vunpack.c.l.b16 %v269
        %v330 = vunpack.c.l.b16 %v270
        %v331 = vunpack.c.l.b16 %v271
        %v332 = vpack.c.b16 %v317, %v316
        %v333 = vpack.c.b16 %v319, %v318
        %v334 = vpack.c.b16 %v321, %v320
        %v335 = vpack.c.b16 %v323, %v322
        %v336 = vpack.c.b16 %v325, %v324
        %v337 = vpack.c.b16 %v327, %v326
        %v338 = vpack.c.b16 %v329, %v328
        %v339 = vpack.c.b16 %v331, %v330
        %348 = vmatpush.bf16.msra.mxu0 %v339
        %349 = vmatpush.bf16.msra.mxu0 %v338
        %350 = vmatpush.bf16.msra.mxu0 %v337
        %351 = vmatpush.bf16.msra.mxu0 %v336
        %352 = vmatpush.bf16.msra.mxu0 %v335
        %353 = vmatpush.bf16.msra.mxu0 %v334
        %354 = vmatpush.bf16.msra.mxu0 %v333
        %355 = vmatpush.bf16.msra.mxu0 %v332
        %356 = vmatmul.bf16.gmra.mxu0 %v296
        %v357 = vpop.f32.mrf.mxu0
        %v358 = vadd.f32 0.0, %v357
        %v359 = vpop.f32.mrf.mxu0
        %v360 = vadd.f32 0.0, %v359
        %361 = vmatmul.bf16.gmra.mxu0 %v297
        %v362 = vpop.f32.mrf.mxu0
        %v363 = vadd.f32 0.0, %v362
        %v364 = vpop.f32.mrf.mxu0
        %v365 = vadd.f32 0.0, %v364
        %366 = vmatmul.bf16.gmra.mxu0 %v298
        %v367 = vpop.f32.mrf.mxu0
        %v368 = vadd.f32 0.0, %v367
        %v369 = vpop.f32.mrf.mxu0
        %v370 = vadd.f32 0.0, %v369
        %371 = vmatmul.bf16.gmra.mxu0 %v299
        %v372 = vpop.f32.mrf.mxu0
        %v373 = vadd.f32 0.0, %v372
        %v374 = vpop.f32.mrf.mxu0
        %v375 = vadd.f32 0.0, %v374
        %376 = vdwg.mxu0
        %v385 = vunpack.c.l.b16 %v272
        %v386 = vunpack.c.l.b16 %v273
        %v387 = vunpack.c.l.b16 %v274
        %v388 = vunpack.c.l.b16 %v275
        %v389 = vunpack.c.l.b16 %v276
        %v390 = vunpack.c.l.b16 %v277
        %v391 = vunpack.c.l.b16 %v278
        %v392 = vunpack.c.l.b16 %v279
        %v393 = vpack.c.b16 %v386, %v385
        %v394 = vpack.c.b16 %v388, %v387
        %v395 = vpack.c.b16 %v390, %v389
        %v396 = vpack.c.b16 %v392, %v391
        %401 = vmatpush.bf16.msra.mxu0 %v339
        %402 = vmatpush.bf16.msra.mxu0 %v338
        %403 = vmatpush.bf16.msra.mxu0 %v337
        %404 = vmatpush.bf16.msra.mxu0 %v336
        %405 = vmatpush.bf16.msra.mxu0 %v335
        %406 = vmatpush.bf16.msra.mxu0 %v334
        %407 = vmatpush.bf16.msra.mxu0 %v333
        %408 = vmatpush.bf16.msra.mxu0 %v332
        %409 = vmatmul.bf16.gmra.mxu0 %v393
        %v410 = vpop.f32.mrf.mxu0
        %v411 = vadd.f32 %v358, %v410
        %v412 = vpop.f32.mrf.mxu0
        %v413 = vadd.f32 %v360, %v412
        %414 = vmatmul.bf16.gmra.mxu0 %v394
        %v415 = vpop.f32.mrf.mxu0
        %v416 = vadd.f32 %v363, %v415
        %v417 = vpop.f32.mrf.mxu0
        %v418 = vadd.f32 %v365, %v417
        %419 = vmatmul.bf16.gmra.mxu0 %v395
        %v420 = vpop.f32.mrf.mxu0
        %v421 = vadd.f32 %v368, %v420
        %v422 = vpop.f32.mrf.mxu0
        %v423 = vadd.f32 %v370, %v422
        %424 = vmatmul.bf16.gmra.mxu0 %v396
        %v425 = vpop.f32.mrf.mxu0
        %v426 = vadd.f32 %v373, %v425
        %v427 = vpop.f32.mrf.mxu0
        %v428 = vadd.f32 %v375, %v427
        %429 = vdwg.mxu0
        %v430 = vmul.f32 %v248, %v248
        %v431 = vmul.f32 %v249, %v249
        %v432 = vmul.f32 %v250, %v250
        %v433 = vmul.f32 %v251, %v251
        %v434 = vmul.f32 %v252, %v252
        %v435 = vmul.f32 %v253, %v253
        %v436 = vmul.f32 %v254, %v254
        %v437 = vmul.f32 %v255, %v255
        %v438 = vpack.c.bf16 %v430, %v430
        %v439 = vpack.c.bf16 %v431, %v431
        %v440 = vpack.c.bf16 %v432, %v432
        %v441 = vpack.c.bf16 %v433, %v433
        %v442 = vpack.c.bf16 %v434, %v434
        %v443 = vpack.c.bf16 %v435, %v435
        %v444 = vpack.c.bf16 %v436, %v436
        %v445 = vpack.c.bf16 %v437, %v437
        %v446 = vunpack.c.l.bf16 %v438
        %v447 = vunpack.c.l.bf16 %v439
        %v448 = vunpack.c.l.bf16 %v440
        %v449 = vunpack.c.l.bf16 %v441
        %v450 = vunpack.c.l.bf16 %v442
        %v451 = vunpack.c.l.bf16 %v443
        %v452 = vunpack.c.l.bf16 %v444
        %v453 = vunpack.c.l.bf16 %v445
        %v454 = vsub.f32 %v430, %v446
        %v455 = vsub.f32 %v431, %v447
        %v456 = vsub.f32 %v432, %v448
        %v457 = vsub.f32 %v433, %v449
        %v458 = vsub.f32 %v434, %v450
        %v459 = vsub.f32 %v435, %v451
        %v460 = vsub.f32 %v436, %v452
        %v461 = vsub.f32 %v437, %v453
        %v462 = vpack.c.bf16 %v455, %v454
        %v463 = vpack.c.bf16 %v457, %v456
        %v464 = vpack.c.bf16 %v459, %v458
        %v465 = vpack.c.bf16 %v461, %v460
        %466 = vmatpush.bf16.msra.mxu0 %v339
        %467 = vmatpush.bf16.msra.mxu0 %v338
        %468 = vmatpush.bf16.msra.mxu0 %v337
        %469 = vmatpush.bf16.msra.mxu0 %v336
        %470 = vmatpush.bf16.msra.mxu0 %v335
        %471 = vmatpush.bf16.msra.mxu0 %v334
        %472 = vmatpush.bf16.msra.mxu0 %v333
        %473 = vmatpush.bf16.msra.mxu0 %v332
        %474 = vmatmul.bf16.gmra.mxu0 %v462
        %v475 = vpop.f32.mrf.mxu0
        %v476 = vadd.f32 0.0, %v475
        %v477 = vpop.f32.mrf.mxu0
        %v478 = vadd.f32 0.0, %v477
        %479 = vmatmul.bf16.gmra.mxu0 %v463
        %v480 = vpop.f32.mrf.mxu0
        %v481 = vadd.f32 0.0, %v480
        %v482 = vpop.f32.mrf.mxu0
        %v483 = vadd.f32 0.0, %v482
        %484 = vmatmul.bf16.gmra.mxu0 %v464
        %v485 = vpop.f32.mrf.mxu0
        %v486 = vadd.f32 0.0, %v485
        %v487 = vpop.f32.mrf.mxu0
        %v488 = vadd.f32 0.0, %v487
        %489 = vmatmul.bf16.gmra.mxu0 %v465
        %v490 = vpop.f32.mrf.mxu0
        %v491 = vadd.f32 0.0, %v490
        %v492 = vpop.f32.mrf.mxu0
        %v493 = vadd.f32 0.0, %v492
        %494 = vdwg.mxu0
        %v503 = vunpack.c.l.b16 %v438
        %v504 = vunpack.c.l.b16 %v439
        %v505 = vunpack.c.l.b16 %v440
        %v506 = vunpack.c.l.b16 %v441
        %v507 = vunpack.c.l.b16 %v442
        %v508 = vunpack.c.l.b16 %v443
        %v509 = vunpack.c.l.b16 %v444
        %v510 = vunpack.c.l.b16 %v445
        %v511 = vpack.c.b16 %v504, %v503
        %v512 = vpack.c.b16 %v506, %v505
        %v513 = vpack.c.b16 %v508, %v507
        %v514 = vpack.c.b16 %v510, %v509
        %519 = vmatpush.bf16.msra.mxu0 %v339
        %520 = vmatpush.bf16.msra.mxu0 %v338
        %521 = vmatpush.bf16.msra.mxu0 %v337
        %522 = vmatpush.bf16.msra.mxu0 %v336
        %523 = vmatpush.bf16.msra.mxu0 %v335
        %524 = vmatpush.bf16.msra.mxu0 %v334
        %525 = vmatpush.bf16.msra.mxu0 %v333
        %526 = vmatpush.bf16.msra.mxu0 %v332
        %527 = vmatmul.bf16.gmra.mxu0 %v511
        %v528 = vpop.f32.mrf.mxu0
        %v529 = vadd.f32 %v476, %v528
        %v530 = vpop.f32.mrf.mxu0
        %v531 = vadd.f32 %v478, %v530
        %532 = vmatmul.bf16.gmra.mxu0 %v512
        %v533 = vpop.f32.mrf.mxu0
        %v534 = vadd.f32 %v481, %v533
        %v535 = vpop.f32.mrf.mxu0
        %v536 = vadd.f32 %v483, %v535
        %537 = vmatmul.bf16.gmra.mxu0 %v513
        %v538 = vpop.f32.mrf.mxu0
        %v539 = vadd.f32 %v486, %v538
        %v540 = vpop.f32.mrf.mxu0
        %v541 = vadd.f32 %v488, %v540
        %542 = vmatmul.bf16.gmra.mxu0 %v514
        %v543 = vpop.f32.mrf.mxu0
        %v544 = vadd.f32 %v491, %v543
        %v545 = vpop.f32.mrf.mxu0
        %v546 = vadd.f32 %v493, %v545
        %547 = vdwg.mxu0
        %v548 = vmul.f32 %v411, 0.03125
        %v549 = vmul.f32 %v413, 0.03125
        %v550 = vmul.f32 %v416, 0.03125
        %v551 = vmul.f32 %v418, 0.03125
        %v552 = vmul.f32 %v421, 0.03125
        %v553 = vmul.f32 %v423, 0.03125
        %v554 = vmul.f32 %v426, 0.03125
        %v555 = vmul.f32 %v428, 0.03125
        %v556 = vmul.f32 %v529, 0.03125
        %v557 = vmul.f32 %v531, 0.03125
        %v558 = vmul.f32 %v534, 0.03125
        %v559 = vmul.f32 %v536, 0.03125
        %v560 = vmul.f32 %v539, 0.03125
        %v561 = vmul.f32 %v541, 0.03125
        %v562 = vmul.f32 %v544, 0.03125
        %v563 = vmul.f32 %v546, 0.03125
        %v564 = vmul.f32 %v548, %v548
        %v565 = vmul.f32 %v549, %v549
        %v566 = vmul.f32 %v550, %v550
        %v567 = vmul.f32 %v551, %v551
        %v568 = vmul.f32 %v552, %v552
        %v569 = vmul.f32 %v553, %v553
        %v570 = vmul.f32 %v554, %v554
        %v571 = vmul.f32 %v555, %v555
        %v572 = vsub.f32 %v556, %v564
        %v573 = vsub.f32 %v557, %v565
        %v574 = vsub.f32 %v558, %v566
        %v575 = vsub.f32 %v559, %v567
        %v576 = vsub.f32 %v560, %v568
        %v577 = vsub.f32 %v561, %v569
        %v578 = vsub.f32 %v562, %v570
        %v579 = vsub.f32 %v563, %v571
        %v580 = vmax.f32 %v572, 0.0
        %v581 = vmax.f32 %v573, 0.0
        %v582 = vmax.f32 %v574, 0.0
        %v583 = vmax.f32 %v575, 0.0
        %v584 = vmax.f32 %v576, 0.0
        %v585 = vmax.f32 %v577, 0.0
        %v586 = vmax.f32 %v578, 0.0
        %v587 = vmax.f32 %v579, 0.0
        %v588 = vadd.f32 %v580, 1e-05
        %v589 = vadd.f32 %v581, 1e-05
        %v590 = vadd.f32 %v582, 1e-05
        %v591 = vadd.f32 %v583, 1e-05
        %v592 = vadd.f32 %v584, 1e-05
        %v593 = vadd.f32 %v585, 1e-05
        %v594 = vadd.f32 %v586, 1e-05
        %v595 = vadd.f32 %v587, 1e-05
        %v596 = vrsqrt.pop %v588
        %v597 = vmul.f32 %v596, %v588
        %v598 = vmul.f32 %v597, %v596
        %v599 = vmul.f32 0.5, %v598
        %v600 = vsub.f32 1.5, %v599
        %v601 = vmul.f32 %v596, %v600
        %vm602 = vweird.f32 %v588
        %vm603 = vweird.f32 %v596
        %vm604 = vmor %vm602, %vm603
        %v605 = vsel %vm604, %v596, %v601
        %v606 = vrsqrt.pop %v589
        %v607 = vmul.f32 %v606, %v589
        %v608 = vmul.f32 %v607, %v606
        %v609 = vmul.f32 0.5, %v608
        %v610 = vsub.f32 1.5, %v609
        %v611 = vmul.f32 %v606, %v610
        %vm612 = vweird.f32 %v589
        %vm613 = vweird.f32 %v606
        %vm614 = vmor %vm612, %vm613
        %v615 = vsel %vm614, %v606, %v611
        %v616 = vrsqrt.pop %v590
        %v617 = vmul.f32 %v616, %v590
        %v618 = vmul.f32 %v617, %v616
        %v619 = vmul.f32 0.5, %v618
        %v620 = vsub.f32 1.5, %v619
        %v621 = vmul.f32 %v616, %v620
        %vm622 = vweird.f32 %v590
        %vm623 = vweird.f32 %v616
        %vm624 = vmor %vm622, %vm623
        %v625 = vsel %vm624, %v616, %v621
        %v626 = vrsqrt.pop %v591
        %v627 = vmul.f32 %v626, %v591
        %v628 = vmul.f32 %v627, %v626
        %v629 = vmul.f32 0.5, %v628
        %v630 = vsub.f32 1.5, %v629
        %v631 = vmul.f32 %v626, %v630
        %vm632 = vweird.f32 %v591
        %vm633 = vweird.f32 %v626
        %vm634 = vmor %vm632, %vm633
        %v635 = vsel %vm634, %v626, %v631
        %v636 = vrsqrt.pop %v592
        %v637 = vmul.f32 %v636, %v592
        %v638 = vmul.f32 %v637, %v636
        %v639 = vmul.f32 0.5, %v638
        %v640 = vsub.f32 1.5, %v639
        %v641 = vmul.f32 %v636, %v640
        %vm642 = vweird.f32 %v592
        %vm643 = vweird.f32 %v636
        %vm644 = vmor %vm642, %vm643
        %v645 = vsel %vm644, %v636, %v641
        %v646 = vrsqrt.pop %v593
        %v647 = vmul.f32 %v646, %v593
        %v648 = vmul.f32 %v647, %v646
        %v649 = vmul.f32 0.5, %v648
        %v650 = vsub.f32 1.5, %v649
        %v651 = vmul.f32 %v646, %v650
        %vm652 = vweird.f32 %v593
        %vm653 = vweird.f32 %v646
        %vm654 = vmor %vm652, %vm653
        %v655 = vsel %vm654, %v646, %v651
        %v656 = vrsqrt.pop %v594
        %v657 = vmul.f32 %v656, %v594
        %v658 = vmul.f32 %v657, %v656
        %v659 = vmul.f32 0.5, %v658
        %v660 = vsub.f32 1.5, %v659
        %v661 = vmul.f32 %v656, %v660
        %vm662 = vweird.f32 %v594
        %vm663 = vweird.f32 %v656
        %vm664 = vmor %vm662, %vm663
        %v665 = vsel %vm664, %v656, %v661
        %v666 = vrsqrt.pop %v595
        %v667 = vmul.f32 %v666, %v595
        %v668 = vmul.f32 %v667, %v666
        %v669 = vmul.f32 0.5, %v668
        %v670 = vsub.f32 1.5, %v669
        %v671 = vmul.f32 %v666, %v670
        %vm672 = vweird.f32 %v595
        %vm673 = vweird.f32 %v666
        %vm674 = vmor %vm672, %vm673
        %v675 = vsel %vm674, %v666, %v671
        %684 = vrot.lane.b32.xlu0 %v548, 4
        %v685 = vpop.permute.xlu0 %684
        %686 = vrot.lane.b32.xlu0 %v549, 4
        %v687 = vpop.permute.xlu0 %686
        %688 = vrot.lane.b32.xlu0 %v550, 4
        %v689 = vpop.permute.xlu0 %688
        %690 = vrot.lane.b32.xlu0 %v551, 4
        %v691 = vpop.permute.xlu0 %690
        %692 = vrot.lane.b32.xlu0 %v552, 4
        %v693 = vpop.permute.xlu0 %692
        %694 = vrot.lane.b32.xlu0 %v553, 4
        %v695 = vpop.permute.xlu0 %694
        %696 = vrot.lane.b32.xlu0 %v554, 4
        %v697 = vpop.permute.xlu0 %696
        %698 = vrot.lane.b32.xlu0 %v555, 4
        %v699 = vpop.permute.xlu0 %698
        %vm708 = vcmask 31744
        %v709 = vsel %vm708, %v605, %v685
        %v710 = vsel %vm708, %v615, %v687
        %v711 = vsel %vm708, %v625, %v689
        %v712 = vsel %vm708, %v635, %v691
        %v713 = vsel %vm708, %v645, %v693
        %v714 = vsel %vm708, %v655, %v695
        %v715 = vsel %vm708, %v665, %v697
        %v716 = vsel %vm708, %v675, %v699
        %v717 = vld [vmem:[%s4] sm:$0xff]
        %v718 = vpack.c.bf16 %v709, %v709
        %v719 = vpack.c.bf16 %v710, %v710
        %v720 = vpack.c.bf16 %v711, %v711
        %v721 = vpack.c.bf16 %v712, %v712
        %v722 = vpack.c.bf16 %v713, %v713
        %v723 = vpack.c.bf16 %v714, %v714
        %v724 = vpack.c.bf16 %v715, %v715
        %v725 = vpack.c.bf16 %v716, %v716
        %v726 = vunpack.c.l.bf16 %v718
        %v727 = vunpack.c.l.bf16 %v719
        %v728 = vunpack.c.l.bf16 %v720
        %v729 = vunpack.c.l.bf16 %v721
        %v730 = vunpack.c.l.bf16 %v722
        %v731 = vunpack.c.l.bf16 %v723
        %v732 = vunpack.c.l.bf16 %v724
        %v733 = vunpack.c.l.bf16 %v725
        %v734 = vsub.f32 %v709, %v726
        %v735 = vsub.f32 %v710, %v727
        %v736 = vsub.f32 %v711, %v728
        %v737 = vsub.f32 %v712, %v729
        %v738 = vsub.f32 %v713, %v730
        %v739 = vsub.f32 %v714, %v731
        %v740 = vsub.f32 %v715, %v732
        %v741 = vsub.f32 %v716, %v733
        %v742 = vpack.c.bf16 %v735, %v734
        %v743 = vpack.c.bf16 %v737, %v736
        %v744 = vpack.c.bf16 %v739, %v738
        %v745 = vpack.c.bf16 %v741, %v740
        %v747 = vunpack.c.l.b16 %v717
        %v748 = vunpack.c.h.b16 %v717
        %v749 = vpack.c.b16 %v747, %v747
        %v750 = vpack.c.b16 %v748, %v748
        %vm751 = vcmask 64512
        %v753 = vsel %vm751, %v742, 0
        %v756 = vsel %vm751, %v743, 0
        %v759 = vsel %vm751, %v744, 0
        %v762 = vsel %vm751, %v745, 0
        %vm764 = vcmask 1043456
        %v766 = vsel %vm764, %v749, 0
        %v769 = vsel %vm764, %v750, 0
        %771 = vmatpush.bf16.msra.mxu0 0
        %772 = vmatpush.bf16.msra.mxu0 0
        %773 = vmatpush.bf16.msra.mxu0 0
        %774 = vmatpush.bf16.msra.mxu0 0
        %775 = vmatpush.bf16.msra.mxu0 0
        %776 = vmatpush.bf16.msra.mxu0 0
        %777 = vmatpush.bf16.msra.mxu0 0
        %778 = vmatpush.bf16.msra.mxu0 %v766
        %779 = vmatmul.bf16.gmra.mxu0 %v753
        %v780 = vpop.f32.mrf.mxu0
        %v781 = vadd.f32 0.0, %v780
        %v782 = vpop.f32.mrf.mxu0
        %v783 = vadd.f32 0.0, %v782
        %784 = vmatmul.bf16.gmra.mxu0 %v756
        %v785 = vpop.f32.mrf.mxu0
        %v786 = vadd.f32 0.0, %v785
        %v787 = vpop.f32.mrf.mxu0
        %v788 = vadd.f32 0.0, %v787
        %789 = vmatmul.bf16.gmra.mxu0 %v759
        %v790 = vpop.f32.mrf.mxu0
        %v791 = vadd.f32 0.0, %v790
        %v792 = vpop.f32.mrf.mxu0
        %v793 = vadd.f32 0.0, %v792
        %794 = vmatmul.bf16.gmra.mxu0 %v762
        %v795 = vpop.f32.mrf.mxu0
        %v796 = vadd.f32 0.0, %v795
        %v797 = vpop.f32.mrf.mxu0
        %v798 = vadd.f32 0.0, %v797
        %799 = vdwg.mxu0
        %800 = vmatpush.bf16.msra.mxu0 0
        %801 = vmatpush.bf16.msra.mxu0 0
        %802 = vmatpush.bf16.msra.mxu0 0
        %803 = vmatpush.bf16.msra.mxu0 0
        %804 = vmatpush.bf16.msra.mxu0 0
        %805 = vmatpush.bf16.msra.mxu0 0
        %806 = vmatpush.bf16.msra.mxu0 0
        %807 = vmatpush.bf16.msra.mxu0 %v769
        %808 = vmatmul.bf16.gmra.mxu0 %v753
        %v809 = vpop.f32.mrf.mxu0
        %v810 = vadd.f32 0.0, %v809
        %v811 = vpop.f32.mrf.mxu0
        %v812 = vadd.f32 0.0, %v811
        %813 = vmatmul.bf16.gmra.mxu0 %v756
        %v814 = vpop.f32.mrf.mxu0
        %v815 = vadd.f32 0.0, %v814
        %v816 = vpop.f32.mrf.mxu0
        %v817 = vadd.f32 0.0, %v816
        %818 = vmatmul.bf16.gmra.mxu0 %v759
        %v819 = vpop.f32.mrf.mxu0
        %v820 = vadd.f32 0.0, %v819
        %v821 = vpop.f32.mrf.mxu0
        %v822 = vadd.f32 0.0, %v821
        %823 = vmatmul.bf16.gmra.mxu0 %v762
        %v824 = vpop.f32.mrf.mxu0
        %v825 = vadd.f32 0.0, %v824
        %v826 = vpop.f32.mrf.mxu0
        %v827 = vadd.f32 0.0, %v826
        %828 = vdwg.mxu0
        %v837 = vunpack.c.l.b16 %v718
        %v838 = vunpack.c.l.b16 %v719
        %v839 = vunpack.c.l.b16 %v720
        %v840 = vunpack.c.l.b16 %v721
        %v841 = vunpack.c.l.b16 %v722
        %v842 = vunpack.c.l.b16 %v723
        %v843 = vunpack.c.l.b16 %v724
        %v844 = vunpack.c.l.b16 %v725
        %v845 = vpack.c.b16 %v838, %v837
        %v846 = vpack.c.b16 %v840, %v839
        %v847 = vpack.c.b16 %v842, %v841
        %v848 = vpack.c.b16 %v844, %v843
        %v850 = vsel %vm751, %v845, 0
        %v853 = vsel %vm751, %v846, 0
        %v856 = vsel %vm751, %v847, 0
        %v859 = vsel %vm751, %v848, 0
        %861 = vmatpush.bf16.msra.mxu0 0
        %862 = vmatpush.bf16.msra.mxu0 0
        %863 = vmatpush.bf16.msra.mxu0 0
        %864 = vmatpush.bf16.msra.mxu0 0
        %865 = vmatpush.bf16.msra.mxu0 0
        %866 = vmatpush.bf16.msra.mxu0 0
        %867 = vmatpush.bf16.msra.mxu0 0
        %868 = vmatpush.bf16.msra.mxu0 %v766
        %869 = vmatmul.bf16.gmra.mxu0 %v850
        %v870 = vpop.f32.mrf.mxu0
        %v871 = vadd.f32 %v781, %v870
        %v872 = vpop.f32.mrf.mxu0
        %v873 = vadd.f32 %v783, %v872
        %874 = vmatmul.bf16.gmra.mxu0 %v853
        %v875 = vpop.f32.mrf.mxu0
        %v876 = vadd.f32 %v786, %v875
        %v877 = vpop.f32.mrf.mxu0
        %v878 = vadd.f32 %v788, %v877
        %879 = vmatmul.bf16.gmra.mxu0 %v856
        %v880 = vpop.f32.mrf.mxu0
        %v881 = vadd.f32 %v791, %v880
        %v882 = vpop.f32.mrf.mxu0
        %v883 = vadd.f32 %v793, %v882
        %884 = vmatmul.bf16.gmra.mxu0 %v859
        %v885 = vpop.f32.mrf.mxu0
        %v886 = vadd.f32 %v796, %v885
        %v887 = vpop.f32.mrf.mxu0
        %v888 = vadd.f32 %v798, %v887
        %889 = vdwg.mxu0
        %890 = vmatpush.bf16.msra.mxu0 0
        %891 = vmatpush.bf16.msra.mxu0 0
        %892 = vmatpush.bf16.msra.mxu0 0
        %893 = vmatpush.bf16.msra.mxu0 0
        %894 = vmatpush.bf16.msra.mxu0 0
        %895 = vmatpush.bf16.msra.mxu0 0
        %896 = vmatpush.bf16.msra.mxu0 0
        %897 = vmatpush.bf16.msra.mxu0 %v769
        %898 = vmatmul.bf16.gmra.mxu0 %v850
        %v899 = vpop.f32.mrf.mxu0
        %v900 = vadd.f32 %v810, %v899
        %v901 = vpop.f32.mrf.mxu0
        %v902 = vadd.f32 %v812, %v901
        %903 = vmatmul.bf16.gmra.mxu0 %v853
        %v904 = vpop.f32.mrf.mxu0
        %v905 = vadd.f32 %v815, %v904
        %v906 = vpop.f32.mrf.mxu0
        %v907 = vadd.f32 %v817, %v906
        %908 = vmatmul.bf16.gmra.mxu0 %v856
        %v909 = vpop.f32.mrf.mxu0
        %v910 = vadd.f32 %v820, %v909
        %v911 = vpop.f32.mrf.mxu0
        %v912 = vadd.f32 %v822, %v911
        %913 = vmatmul.bf16.gmra.mxu0 %v859
        %v914 = vpop.f32.mrf.mxu0
        %v915 = vadd.f32 %v825, %v914
        %v916 = vpop.f32.mrf.mxu0
        %v917 = vadd.f32 %v827, %v916
        %918 = vdwg.mxu0
        %v919 = vsub.f32 %v248, %v900
        %v920 = vsub.f32 %v249, %v902
        %v921 = vsub.f32 %v250, %v905
        %v922 = vsub.f32 %v251, %v907
        %v923 = vsub.f32 %v252, %v910
        %v924 = vsub.f32 %v253, %v912
        %v925 = vsub.f32 %v254, %v915
        %v926 = vsub.f32 %v255, %v917
        %v927 = vmul.f32 %v919, %v871
        %v928 = vmul.f32 %v920, %v873
        %v929 = vmul.f32 %v921, %v876
        %v930 = vmul.f32 %v922, %v878
        %v931 = vmul.f32 %v923, %v881
        %v932 = vmul.f32 %v924, %v883
        %v933 = vmul.f32 %v925, %v886
        %v934 = vmul.f32 %v926, %v888
        %v935 = vld [vmem:[%s1] sm:$0x1]
        %v937 = vperm.slane %v935, 0
        %v939 = vmul.f32 %v927, %v937
        %v940 = vmul.f32 %v928, %v937
        %v941 = vmul.f32 %v929, %v937
        %v942 = vmul.f32 %v930, %v937
        %v943 = vmul.f32 %v931, %v937
        %v944 = vmul.f32 %v932, %v937
        %v945 = vmul.f32 %v933, %v937
        %v946 = vmul.f32 %v934, %v937
        %v947 = vld [vmem:[%s2] sm:$0x1]
        %v949 = vperm.slane %v947, 0
        %v951 = vadd.f32 %v939, %v949
        %v952 = vadd.f32 %v940, %v949
        %v953 = vadd.f32 %v941, %v949
        %v954 = vadd.f32 %v942, %v949
        %v955 = vadd.f32 %v943, %v949
        %v956 = vadd.f32 %v944, %v949
        %v957 = vadd.f32 %v945, %v949
        %v958 = vadd.f32 %v946, %v949
        %959 = vst [vmem:[%s244] sm:$0xff] %v951
        %960 = vst [vmem:[%s244 + $0x8] sm:$0xff] %v952
        %961 = vst [vmem:[%s244 + $0x10] sm:$0xff] %v953
        %962 = vst [vmem:[%s244 + $0x18] sm:$0xff] %v954
        %963 = vst [vmem:[%s244 + $0x20] sm:$0xff] %v955
        %964 = vst [vmem:[%s244 + $0x28] sm:$0xff] %v956
        %965 = vst [vmem:[%s244 + $0x30] sm:$0xff] %v957
        %966 = vst [vmem:[%s244 + $0x38] sm:$0xff] %v958
        %s967 = sand.u32 %s140, 1
        %s968 = scalar_lea.sflag [#allocation4], %s967
        %s969 = sand.u32 %s140, 1
        %s970 = smul.addr %s969, 64
        %s971 = scalar_lea.vmem [#allocation5], %s970
        // Predicated region
        $region45: #{tpu_custom_call.1} parent=39 // pred_check
          %p972 = pneg %p150
        $region46: #{tpu_custom_call.1} parent=39 // pred_check_branch
          %974 = sbr.rel (%p972) target = $region48
        $region47: #{tpu_custom_call.1} parent=39 // pred_region
          %s975 = smul.u32 8, %s22
          %977 = vsyncadd %s968, 0
          %s978 = smul.addr %s975, 8
          %s979 = scalar_lea.hbm %s5, %s978
          %s980 = sshll.u32 %s971, 4
          %s981 = int_to_ptr.vmem [resolvable:$true] %s980
          %s982 = sshll.u32 %s979, 4
          %s983 = int_to_ptr.hbm [resolvable:$true] %s982
          %988 = dma.vmem_to_hbm [thread:$0]  %s981, 1024, %s983, %s968, 128, 128, 8
        $region48: #{tpu_custom_call.1} parent=39 // pred_fallthru
          _
      $region40: #{tpu_custom_call.1} parent=5 // pred_fallthru
        _
      %p989 = scmp.le.s32.totalorder 2, %s17
      // Predicated region
      $region49: #{tpu_custom_call.1} parent=5 // pred_check
        %p990 = pneg %p989
      $region50: #{tpu_custom_call.1} parent=5 // pred_check_branch
        %992 = sbr.rel (%p990) target = $region52
      $region51: #{tpu_custom_call.1} parent=5 // pred_region
        %s993 = ssub.s32 %s17, 2
        // Predicated region
        $region53: #{tpu_custom_call.1} parent=51 // pred_check
          %p994 = pneg %p156
        $region54: #{tpu_custom_call.1} parent=51 // pred_check_branch
          %996 = sbr.rel (%p994) target = $region56
        $region55: #{tpu_custom_call.1} parent=51 // pred_region
          %s997 = sand.u32 %s141, 1
          %s998 = scalar_lea.sflag [#allocation4], %s997
          %s999 = sand.u32 %s141, 1
          %s1000 = smul.addr %s999, 64
          %s1001 = scalar_lea.vmem [#allocation5], %s1000
          %1003 = dma.done %s998, 1024
        $region56: #{tpu_custom_call.1} parent=51 // pred_fallthru
          _
      $region52: #{tpu_custom_call.1} parent=5 // pred_fallthru
        _
    $region6: #{tpu_custom_call.1} parent=1 // loop_footer
      %s21 = sadd.s32 1, %s17
    $region7: #{tpu_custom_call.1} parent=1 // loop_footer_branch
      %16 = sbr.rel target = $region3
    $region8: #{tpu_custom_call.1} parent=1 // loop_exit
      _
    %1004 = vsyncpa [#allocation3], 1
    %s1005 = scalar_lea.sflag [#allocation3], 1
    %1006 = vsyncpa %s1005, 1
    %1007 = vsyncpa [#allocation4], 1
    %s1008 = scalar_lea.sflag [#allocation4], 1
    %1009 = vsyncpa %s1008, 1

</llo_original>
